<compile_context>
chip_gen: v6e
topology: v6e:2x2x1
jax: 0.10.0
libtpu: 0.0.40
codegen_flags: <defaults>
</compile_context>

<pallas_src>
import functools

import jax
import jax.numpy as jnp
from jax import lax
from jax.experimental import pallas as pl
from jax.experimental.pallas import tpu as pltpu

IN_EPS = 1e-3   # InstanceNorm2d eps
BN_EPS = 1e-5   # BatchNorm2d eps (PyTorch default)

_MIB = 1024 * 1024


def _vmem_physical_bytes():
    """Physical VMEM per TensorCore; conservative 64 MiB if unknown."""
    try:
        info = pltpu.get_tpu_info()
        for name in ("vmem_capacity_bytes", "vmem_bytes", "vmem_size_bytes"):
            v = getattr(info, name, None)
            if v:
                return int(v)
    except Exception:
        pass
    return 64 * _MIB


_VMEM_PHYS = _vmem_physical_bytes()
# Scoped VMEM limit requested from the compiler: ~48 MiB on v7x (64 MiB phys),
# 96 MiB on v5e/v6e (128 MiB phys).  Never blindly inherit a v6e budget on v7x.
_VMEM_LIMIT = int(max(32 * _MIB, min(_VMEM_PHYS * 3 // 4, 96 * _MIB)))
_FUSED_BUDGET = _VMEM_LIMIT - 8 * _MIB   # gate for the whole-slab fused path
_TILE_BUDGET = _VMEM_LIMIT // 2          # per-step working set, tiled path


def _round_up(x, m):
    return (x + m - 1) // m * m


def _pick_tn(n, c, c_out, in_item, out_item, tn_max):
    """Largest lane tile (multiple of 128) fitting the per-step VMEM budget."""
    cap = min(int(tn_max), _round_up(n, 128))
    cap = max(128, (cap // 128) * 128)

    def est(t):
        # double-buffered x tile + double-buffered out tile + f32 intermediates
        return (2 * c * t * in_item + 2 * c_out * t * out_item
                + 2 * (c + c_out) * t * 4)

    tn = cap
    while tn > 128 and est(tn) > _TILE_BUDGET:
        tn -= 128
    # Prefer a tile that divides N exactly (H*W is almost always 128-aligned)
    # so the last tile needs no in-kernel masking.
    if n % 128 == 0:
        while tn > 128 and n % tn != 0:
            tn -= 128
    return tn


# ---------------------------------------------------------------------------
# Kernels
# ---------------------------------------------------------------------------
def _fused_kernel(bn_ref, x_ref, w_ref, b_ref, o_ref):
    """Whole [C, N] slab resident: stats + IN/BN affine + ReLU + 1x1 conv."""
    x = x_ref[0].astype(jnp.float32)                        # [C, N]
    inv_n = 1.0 / x.shape[1]
    mean = jnp.sum(x, axis=1, keepdims=True) * inv_n        # [C, 1]
    xc = x - mean
    var = jnp.sum(xc * xc, axis=1, keepdims=True) * inv_n   # two-pass variance
    rstd = lax.rsqrt(var + IN_EPS)
    bn = bn_ref[...]                                        # [C, 2] scale/shift
    xr = jnp.maximum(xc * (rstd * bn[:, 0:1]) + bn[:, 1:2], 0.0)
    w = w_ref[...]                                          # [C_out, C]
    y = jnp.dot(w, xr.astype(w.dtype), preferred_element_type=jnp.float32)
    o_ref[0] = (y + b_ref[...].astype(jnp.float32)).astype(o_ref.dtype)


def _stats_kernel(x_ref, s_ref, *, n_total, tn):
    """Accumulate per-(batch, channel) [sum, sum-of-squares] over N tiles."""
    x = x_ref[0].astype(jnp.float32)                        # [C, TN]
    if n_total % tn != 0:
        # Mask out-of-bounds lanes of the partial last tile (garbage reads).
        valid = n_total - pl.program_id(1) * tn
        lane = lax.broadcasted_iota(jnp.int32, x.shape, 1)
        x = jnp.where(lane < valid, x, 0.0)
    t1 = jnp.sum(x, axis=1, keepdims=True)                  # [C, 1]
    t2 = jnp.sum(x * x, axis=1, keepdims=True)              # [C, 1]
    col = lax.broadcasted_iota(jnp.int32, (t1.shape[0], 2), 1)
    t = jnp.where(col == 0, t1, t2)                         # packed [C, 2]

    @pl.when(pl.program_id(1) == 0)
    def _():
        s_ref[0] = t

    @pl.when(pl.program_id(1) > 0)
    def _():
        s_ref[0] += t


def _tile_kernel(ss_ref, x_ref, w_ref, b_ref, o_ref):
    """Fused (IN + eval-BN) affine -> ReLU -> 1x1 conv on one [C, TN] tile."""
    ss = ss_ref[0]                                          # [C, 2] scale/shift
    x = x_ref[0].astype(jnp.float32)                        # [C, TN]
    xr = jnp.maximum(x * ss[:, 0:1] + ss[:, 1:2], 0.0)      # single FMA + ReLU
    w = w_ref[...]                                          # [C_out, C]
    y = jnp.dot(w, xr.astype(w.dtype), preferred_element_type=jnp.float32)
    o_ref[0] = (y + b_ref[...].astype(jnp.float32)).astype(o_ref.dtype)


# ---------------------------------------------------------------------------
# Wrapper
# ---------------------------------------------------------------------------
@functools.partial(jax.jit, static_argnames=("tn_max", "force_two_pass"))
def mlps_forward(x, params, *, tn_max=65536, force_two_pass=False):
    """x: [B, C, H, W] -> [B, C_out, H, W] (same dtype as x)."""
    B, C, H, W = x.shape
    N = H * W
    conv_w = params["conv_w"]
    C_out = conv_w.shape[0]
    w2d = conv_w.reshape(C_out, C)                 # keep HBM dtype (bf16 ok)
    b2d = params["conv_b"].reshape(C_out, 1)

    out_dtype = x.dtype
    in_item = jnp.dtype(x.dtype).itemsize
    out_item = jnp.dtype(out_dtype).itemsize
    w_item = jnp.dtype(w2d.dtype).itemsize

    xf = x.reshape(B, C, N)                        # free reshape, no pad/copy

    # Eval-mode BatchNorm folded into one per-channel affine.
    gamma = params["bn_gamma"].reshape(C, 1).astype(jnp.float32)
    beta = params["bn_beta"].reshape(C, 1).astype(jnp.float32)
    rmean = params["bn_running_mean"].reshape(C, 1).astype(jnp.float32)
    rvar = params["bn_running_var"].reshape(C, 1).astype(jnp.float32)
    bn_scale = gamma * lax.rsqrt(rvar + BN_EPS)    # [C, 1]
    bn_shift = beta - rmean * bn_scale             # [C, 1]

    # ---- Fused single-pass path: whole [C, N] slab resident in VMEM ----
    fused_bytes = (2 * C * N * in_item + 2 * C_out * N * out_item
                   + 3 * C * N * 4 + 2 * C_out * N * 4 + C_out * C * w_item)
    if not force_two_pass and fused_bytes <= _FUSED_BUDGET:
        bn_packed = jnp.concatenate([bn_scale, bn_shift], axis=1)   # [C, 2]
        cost = pl.CostEstimate(
            flops=2 * B * C_out * C * N + 7 * B * C * N,
            transcendentals=0,
            bytes_accessed=int(B * C * N * in_item + B * C_out * N * out_item
                               + C_out * C * w_item))
        out = pl.pallas_call(
            _fused_kernel,
            out_shape=jax.ShapeDtypeStruct((B, C_out, N), out_dtype),
            grid=(B,),
            in_specs=[
                pl.BlockSpec((C, 2), lambda b: (0, 0)),          # BN affine
                pl.BlockSpec((1, C, N), lambda b: (b, 0, 0)),    # x slab
                pl.BlockSpec((C_out, C), lambda b: (0, 0)),      # conv weight
                pl.BlockSpec((C_out, 1), lambda b: (0, 0)),      # conv bias
            ],
            out_specs=pl.BlockSpec((1, C_out, N), lambda b: (b, 0, 0)),
            compiler_params=pltpu.CompilerParams(
                dimension_semantics=("parallel",),
                vmem_limit_bytes=_VMEM_LIMIT),
            cost_estimate=cost,
        )(bn_packed, xf, w2d, b2d)
        return out.reshape(B, C_out, H, W)

    # ---- Fallback: two-pass tiled path for slabs that do not fit VMEM ----
    tn = _pick_tn(N, C, C_out, in_item, out_item, tn_max)
    n_tiles = pl.cdiv(N, tn)

    stats = pl.pallas_call(
        functools.partial(_stats_kernel, n_total=N, tn=tn),
        out_shape=jax.ShapeDtypeStruct((B, C, 2), jnp.float32),
        grid=(B, n_tiles),
        in_specs=[pl.BlockSpec((1, C, tn), lambda b, n: (b, 0, n))],
        out_specs=pl.BlockSpec((1, C, 2), lambda b, n: (b, 0, 0)),
        compiler_params=pltpu.CompilerParams(
            dimension_semantics=("parallel", "arbitrary"),
            vmem_limit_bytes=_VMEM_LIMIT),
        cost_estimate=pl.CostEstimate(
            flops=3 * B * C * N, transcendentals=0,
            bytes_accessed=int(B * C * N * in_item + B * C * 2 * 4)),
    )(xf)

    # Single-pass variance (E[x^2] - mean^2) accumulated in f32.
    # TODO(synk): switch to Kahan / two-pass accumulation if inputs are far
    # from zero-centered (catastrophic cancellation risk for huge N).
    mean = stats[:, :, 0:1] / float(N)                         # [B, C, 1]
    var = jnp.maximum(stats[:, :, 1:2] / float(N) - mean * mean, 0.0)
    rstd = lax.rsqrt(var + IN_EPS)
    scale = rstd * bn_scale[None]                              # [B, C, 1]
    shift = bn_shift[None] - mean * scale                      # [B, C, 1]
    ss = jnp.concatenate([scale, shift], axis=2)               # [B, C, 2]

    out = pl.pallas_call(
        _tile_kernel,
        out_shape=jax.ShapeDtypeStruct((B, C_out, N), out_dtype),
        grid=(B, n_tiles),
        in_specs=[
            pl.BlockSpec((1, C, 2), lambda b, n: (b, 0, 0)),   # fused affine
            pl.BlockSpec((1, C, tn), lambda b, n: (b, 0, n)),  # x tile
            pl.BlockSpec((C_out, C), lambda b, n: (0, 0)),     # conv weight
            pl.BlockSpec((C_out, 1), lambda b, n: (0, 0)),     # conv bias
        ],
        out_specs=pl.BlockSpec((1, C_out, tn), lambda b, n: (b, 0, n)),
        compiler_params=pltpu.CompilerParams(
            dimension_semantics=("parallel", "parallel"),
            vmem_limit_bytes=_VMEM_LIMIT),
        cost_estimate=pl.CostEstimate(
            flops=2 * B * C_out * C * N + 3 * B * C * N,
            transcendentals=0,
            bytes_accessed=int(B * C * N * in_item + B * C_out * N * out_item
                               + C_out * C * w_item)),
    )(ss, xf, w2d, b2d)
    return out.reshape(B, C_out, H, W)


def _reference_forward(x, params):
    """Pure-JAX reference with identical (eval-mode) semantics."""
    B, C, H, W = x.shape
    N = H * W
    xf = x.reshape(B, C, N).astype(jnp.float32)
    mean = jnp.mean(xf, axis=2, keepdims=True)
    var = jnp.mean((xf - mean) ** 2, axis=2, keepdims=True)
    xn = (xf - mean) / jnp.sqrt(var + IN_EPS)
    g = params["bn_gamma"].reshape(1, C, 1).astype(jnp.float32)
    b = params["bn_beta"].reshape(1, C, 1).astype(jnp.float32)
    rm = params["bn_running_mean"].reshape(1, C, 1).astype(jnp.float32)
    rv = params["bn_running_var"].reshape(1, C, 1).astype(jnp.float32)
    xb = (xn - rm) / jnp.sqrt(rv + BN_EPS) * g + b
    xr = jnp.maximum(xb, 0.0)
    w = params["conv_w"]
    C_out = w.shape[0]
    w2d = w.reshape(C_out, C).astype(jnp.float32)
    cb = params["conv_b"].reshape(1, C_out, 1).astype(jnp.float32)
    out = jnp.einsum("oc,bcn->bon", w2d, xr) + cb
    return out.reshape(B, C_out, H, W)


if __name__ == "__main__":
    B, C, H, W = 2, 4, 16, 16
    C_out = 8

    key = jax.random.PRNGKey(0)
    k = jax.random.split(key, 7)
    x = jax.random.normal(k[0], (B, C, H, W), dtype=jnp.float32)
    params = {
        "bn_gamma": jax.random.normal(k[1], (C,), jnp.float32) * 0.1 + 1.0,
        "bn_beta": jax.random.normal(k[2], (C,), jnp.float32) * 0.1,
        "bn_running_mean": jax.random.normal(k[3], (C,), jnp.float32) * 0.1,
        "bn_running_var": jnp.abs(jax.random.normal(k[4], (C,), jnp.float32)) * 0.1 + 1.0,
        "conv_w": jax.random.normal(k[5], (C_out, C, 1, 1), jnp.float32) * 0.5,
        "conv_b": jax.random.normal(k[6], (C_out,), jnp.float32) * 0.1,
    }

    ref = jax.block_until_ready(_reference_forward(x, params))

    # f32, fused single-pass path (per-batch slab resident in VMEM).
    out = jax.block_until_ready(mlps_forward(x, params))
    assert out.shape == (B, C_out, H, W), out.shape
    assert jnp.allclose(out, ref, atol=1e-4, rtol=1e-4), "fused f32 mismatch"

    # f32, forced two-pass tiled fallback (2 N-tiles): exercises the stats
    # accumulation and the tiled main kernel.
    out2 = jax.block_until_ready(
        mlps_forward(x, params, tn_max=128, force_two_pass=True))
    assert jnp.allclose(out2, ref, atol=1e-4, rtol=1e-4), "tiled f32 mismatch"

    # bf16-in-HBM path: halves HBM traffic and feeds the MXU in bf16; norm
    # math stays f32 in-kernel, so only matmul/output precision differs.
    x_bf = x.astype(jnp.bfloat16)
    params_bf = dict(params,
                     conv_w=params["conv_w"].astype(jnp.bfloat16),
                     conv_b=params["conv_b"].astype(jnp.bfloat16))
    out_bf = jax.block_until_ready(mlps_forward(x_bf, params_bf))
    ref_bf = jax.block_until_ready(_reference_forward(x_bf, params_bf))
    assert out_bf.dtype == jnp.bfloat16
    assert jnp.allclose(out_bf.astype(jnp.float32), ref_bf, atol=1e-1, rtol=1e-1), \
        "bf16 mismatch vs reference"

    print("KERNEL_OK")
</pallas_src>

<mosaic_0001>
module attributes {stable_mosaic.version = 11 : i64} {
  func.func @_fused_kernel(%arg0: i32, %arg1: memref<4x2xf32, #tpu.memory_space<vmem>>, %arg2: memref<1x4x256xf32, #tpu.memory_space<vmem>>, %arg3: memref<8x4xf32, #tpu.memory_space<vmem>>, %arg4: memref<8x1xf32, #tpu.memory_space<vmem>>, %arg5: memref<1x8x256xf32, #tpu.memory_space<vmem>>) attributes {dimension_semantics = [#tpu.dimension_semantics<parallel>], iteration_bounds = array<i64: 2>, scalar_prefetch = 0 : i64, scratch_operands = 0 : i64, tpu.core_type = #tpu.core_type<tc>, window_params = [{pipeline_mode = #tpu.pipeline_mode<synchronous>, transform_indices = @transform_0, window_bounds = array<i64: 4, 2>}, {transform_indices = @transform_1, window_bounds = array<i64: 1, 4, 256>}, {pipeline_mode = #tpu.pipeline_mode<synchronous>, transform_indices = @transform_2, window_bounds = array<i64: 8, 4>}, {pipeline_mode = #tpu.pipeline_mode<synchronous>, transform_indices = @transform_3, window_bounds = array<i64: 8, 1>}, {transform_indices = @transform_4, window_bounds = array<i64: 1, 8, 256>}]} {
    %c0 = arith.constant 0 : index
    %c0_0 = arith.constant 0 : index
    %c0_1 = arith.constant 0 : index
    %0 = vector.load %arg2[%c0, %c0_0, %c0_1] : memref<1x4x256xf32, #tpu.memory_space<vmem>>, vector<1x4x256xf32>
    %1 = vector.shape_cast %0 : vector<1x4x256xf32> to vector<4x256xf32>
    %cst = arith.constant dense<0.000000e+00> : vector<4xf32>
    %2 = vector.multi_reduction <add>, %1, %cst [1] : vector<4x256xf32> to vector<4xf32>
    %3 = vector.shape_cast %2 : vector<4xf32> to vector<4x1xf32>
    %cst_2 = arith.constant 3.906250e-03 : f32
    %4 = vector.broadcast %cst_2 : f32 to vector<4x1xf32>
    %5 = arith.mulf %3, %4 : vector<4x1xf32>
    %6 = vector.broadcast %5 : vector<4x1xf32> to vector<4x256xf32>
    %7 = arith.subf %1, %6 : vector<4x256xf32>
    %8 = arith.mulf %7, %7 : vector<4x256xf32>
    %cst_3 = arith.constant dense<0.000000e+00> : vector<4xf32>
    %9 = vector.multi_reduction <add>, %8, %cst_3 [1] : vector<4x256xf32> to vector<4xf32>
    %10 = vector.shape_cast %9 : vector<4xf32> to vector<4x1xf32>
    %cst_4 = arith.constant 3.906250e-03 : f32
    %11 = vector.broadcast %cst_4 : f32 to vector<4x1xf32>
    %12 = arith.mulf %10, %11 : vector<4x1xf32>
    %cst_5 = arith.constant 1.000000e-03 : f32
    %13 = vector.broadcast %cst_5 : f32 to vector<4x1xf32>
    %14 = arith.addf %12, %13 : vector<4x1xf32>
    %15 = math.rsqrt %14 : vector<4x1xf32>
    %c0_6 = arith.constant 0 : index
    %c0_7 = arith.constant 0 : index
    %16 = vector.load %arg1[%c0_6, %c0_7] : memref<4x2xf32, #tpu.memory_space<vmem>>, vector<4x2xf32>
    %17 = vector.extract_strided_slice %16 {offsets = [0, 0], sizes = [4, 1], strides = [1, 1]} : vector<4x2xf32> to vector<4x1xf32>
    %18 = arith.mulf %15, %17 : vector<4x1xf32>
    %19 = vector.broadcast %18 : vector<4x1xf32> to vector<4x256xf32>
    %20 = arith.mulf %7, %19 : vector<4x256xf32>
    %21 = vector.extract_strided_slice %16 {offsets = [0, 1], sizes = [4, 1], strides = [1, 1]} : vector<4x2xf32> to vector<4x1xf32>
    %22 = vector.broadcast %21 : vector<4x1xf32> to vector<4x256xf32>
    %23 = arith.addf %20, %22 : vector<4x256xf32>
    %cst_8 = arith.constant 0.000000e+00 : f32
    %24 = vector.broadcast %cst_8 : f32 to vector<4x256xf32>
    %25 = arith.maximumf %23, %24 : vector<4x256xf32>
    %c0_9 = arith.constant 0 : index
    %c0_10 = arith.constant 0 : index
    %26 = vector.load %arg3[%c0_9, %c0_10] : memref<8x4xf32, #tpu.memory_space<vmem>>, vector<8x4xf32>
    %cst_11 = arith.constant dense<0.000000e+00> : vector<8x256xf32>
    %27 = tpu.matmul %26, %25, %cst_11 {dimension_numbers = #tpu.dot_dimension_numbers<[1], [0], [0], [1], [0, 0, 1, 1], [], []>} : vector<8x4xf32>, vector<4x256xf32>, vector<8x256xf32> -> vector<8x256xf32>
    %c0_12 = arith.constant 0 : index
    %c0_13 = arith.constant 0 : index
    %28 = vector.load %arg4[%c0_12, %c0_13] : memref<8x1xf32, #tpu.memory_space<vmem>>, vector<8x1xf32>
    %29 = vector.broadcast %28 : vector<8x1xf32> to vector<8x256xf32>
    %30 = arith.addf %27, %29 : vector<8x256xf32>
    %c0_14 = arith.constant 0 : index
    %c0_15 = arith.constant 0 : index
    %c0_16 = arith.constant 0 : index
    %31 = vector.load %arg5[%c0_14, %c0_15, %c0_16] : memref<1x8x256xf32, #tpu.memory_space<vmem>>, vector<1x8x256xf32>
    %32 = vector.shape_cast %31 : vector<1x8x256xf32> to vector<8x256xf32>
    %33 = vector.shape_cast %30 : vector<8x256xf32> to vector<1x8x256xf32>
    tpu.vector_store %arg5[%c0_14, %c0_15, %c0_16], %33 {strides = array<i32>} : memref<1x8x256xf32, #tpu.memory_space<vmem>>, vector<1x8x256xf32>,
    return
  }
  func.func @transform_0(%arg0: i32) -> (i32, i32) {
    %c0_i32 = arith.constant 0 : i32
    %c0_i32_0 = arith.constant 0 : i32
    %c0_i32_1 = arith.constant 0 : i32
    return %c0_i32, %c0_i32_0 : i32, i32
  }
  func.func @transform_1(%arg0: i32) -> (i32, i32, i32) {
    %c0_i32 = arith.constant 0 : i32
    %c0_i32_0 = arith.constant 0 : i32
    %c0_i32_1 = arith.constant 0 : i32
    return %arg0, %c0_i32, %c0_i32_0 : i32, i32, i32
  }
  func.func @transform_2(%arg0: i32) -> (i32, i32) {
    %c0_i32 = arith.constant 0 : i32
    %c0_i32_0 = arith.constant 0 : i32
    %c0_i32_1 = arith.constant 0 : i32
    return %c0_i32, %c0_i32_0 : i32, i32
  }
  func.func @transform_3(%arg0: i32) -> (i32, i32) {
    %c0_i32 = arith.constant 0 : i32
    %c0_i32_0 = arith.constant 0 : i32
    %c0_i32_1 = arith.constant 0 : i32
    return %c0_i32, %c0_i32_0 : i32, i32
  }
  func.func @transform_4(%arg0: i32) -> (i32, i32, i32) {
    %c0_i32 = arith.constant 0 : i32
    %c0_i32_0 = arith.constant 0 : i32
    %c0_i32_1 = arith.constant 0 : i32
    return %arg0, %c0_i32, %c0_i32_0 : i32, i32, i32
  }
}

</mosaic_0001>

<llo_original>
// kernel: mlps_forward.1
$region0: #{mlps_forward.1}
  #allocation0 [shape = 'u32[]', space=smem, size = 0x4, offset = 0x4, fixed_abs, tag = 'smem constant byte address 0x4 - core index']
  #allocation1 [shape = 'u32[144,128]{1,0:T(1,128)}', space=vmem, size = 0x12000, scoped, tag = 'internal scratch']
  %s0 = inlined_call_operand.vmem [shape: f32[4,2], index: 0, kind: input, shape index: {}]
  %s1 = inlined_call_operand.vmem [shape: f32[2,4,256], index: 1, kind: input, shape index: {}]
  %s2 = inlined_call_operand.vmem [shape: f32[8,4], index: 2, kind: input, shape index: {}]
  %s3 = inlined_call_operand.vmem [shape: f32[8,1], index: 3, kind: input, shape index: {}]
  %s4 = inlined_call_operand.vmem [shape: f32[2,8,256], index: 4, kind: output, shape index: {}]
  %s5 = sld [smem:[#allocation0]]
  $region49: #{mlps_forward.1} parent=0
    _
  %s7 = ssub.s32 1, %s5
  %s8 = scalar_select 0, %s7, %s5
  loop: start=0, step=1, limit=4
  $region2: #{mlps_forward.1} parent=0 // loop_pre_header
    _
  $region3: #{mlps_forward.1} parent=0 // loop_header
    %s10 = sphi 0, %s14
    %p11 = scmp.ge.s32.totalorder %s10, 4
    %s18 = sphi 0, %s18
    %s20 = sphi 0, %s18
    %s21 = sphi 0, %s20
    %s35 = sphi 0, %s21
    %s41 = sphi 0, %s43
    %s44 = sphi 0, %s41
    %s45 = sphi 0, %s44
    %s61 = sphi 0, %s45
    %s65 = sphi 0, %s65
    %s67 = sphi 0, %s65
    %s68 = sphi 0, %s67
    %s82 = sphi 0, %s68
    %s86 = sphi 0, %s86
    %s88 = sphi 0, %s86
    %s89 = sphi 0, %s88
    %s103 = sphi 0, %s89
    %s109 = sphi 0, %s111
    %s112 = sphi 0, %s109
    %s113 = sphi 0, %s112
    %s129 = sphi 0, %s113
  $region4: #{mlps_forward.1} parent=0 // loop_header_branch
    %13 = sbr.rel (%p11) target = $region8
  $region5: #{mlps_forward.1} parent=0 // loop_body
    %s15 = ssub.s32 %s10, 1
    %s16 = ssub.s32 %s10, 2
    %s17 = sadd.s32 %s10, 1
    %s19 = sadd.s32 %s18, 1
    %p22 = scmp.eq.s32.totalorder %s10, 1
    %p23 = scmp.ne.s32.totalorder %s18, %s20
    %p24 = scmp.eq.s32.totalorder %s10, 0
    %p25 = por %p23, %p24
    %p26 = scmp.ne.s32.totalorder %s18, %s20
    %p27 = scmp.eq.s32.totalorder %s15, 1
    %p28 = por %p26, %p27
    %p29 = scmp.ne.s32.totalorder %s20, %s21
    %p30 = scmp.eq.s32.totalorder %s15, 0
    %p31 = por %p29, %p30
    %p32 = scmp.ne.s32.totalorder %s20, %s21
    %p33 = scmp.eq.s32.totalorder %s16, 1
    %p34 = por %p32, %p33
    %p36 = scmp.ne.s32.totalorder %s21, %s35
    %p37 = scmp.eq.s32.totalorder %s16, 0
    %p38 = por %p36, %p37
    %s39 = ssub.s32 %s10, %s17
    %p40 = scmp.eq.s32.totalorder %s39, 0
    %s42 = sadd.s32 %s41, 1
    %s43 = scalar_select %p40, %s41, %s42
    %p46 = pneg %p40
    %p47 = scmp.eq.s32.totalorder %s10, 1
    %p48 = por %p46, %p47
    %p49 = scmp.ne.s32.totalorder %s41, %s44
    %p50 = scmp.eq.s32.totalorder %s10, 0
    %p51 = por %p49, %p50
    %p52 = scmp.ne.s32.totalorder %s41, %s44
    %p53 = scmp.eq.s32.totalorder %s15, 1
    %p54 = por %p52, %p53
    %p55 = scmp.ne.s32.totalorder %s44, %s45
    %p56 = scmp.eq.s32.totalorder %s15, 0
    %p57 = por %p55, %p56
    %p58 = scmp.ne.s32.totalorder %s44, %s45
    %p59 = scmp.eq.s32.totalorder %s16, 1
    %p60 = por %p58, %p59
    %p62 = scmp.ne.s32.totalorder %s45, %s61
    %p63 = scmp.eq.s32.totalorder %s16, 0
    %p64 = por %p62, %p63
    %s66 = sadd.s32 %s65, 1
    %p69 = scmp.eq.s32.totalorder %s10, 1
    %p70 = scmp.ne.s32.totalorder %s65, %s67
    %p71 = scmp.eq.s32.totalorder %s10, 0
    %p72 = por %p70, %p71
    %p73 = scmp.ne.s32.totalorder %s65, %s67
    %p74 = scmp.eq.s32.totalorder %s15, 1
    %p75 = por %p73, %p74
    %p76 = scmp.ne.s32.totalorder %s67, %s68
    %p77 = scmp.eq.s32.totalorder %s15, 0
    %p78 = por %p76, %p77
    %p79 = scmp.ne.s32.totalorder %s67, %s68
    %p80 = scmp.eq.s32.totalorder %s16, 1
    %p81 = por %p79, %p80
    %p83 = scmp.ne.s32.totalorder %s68, %s82
    %p84 = scmp.eq.s32.totalorder %s16, 0
    %p85 = por %p83, %p84
    %s87 = sadd.s32 %s86, 1
    %p90 = scmp.eq.s32.totalorder %s10, 1
    %p91 = scmp.ne.s32.totalorder %s86, %s88
    %p92 = scmp.eq.s32.totalorder %s10, 0
    %p93 = por %p91, %p92
    %p94 = scmp.ne.s32.totalorder %s86, %s88
    %p95 = scmp.eq.s32.totalorder %s15, 1
    %p96 = por %p94, %p95
    %p97 = scmp.ne.s32.totalorder %s88, %s89
    %p98 = scmp.eq.s32.totalorder %s15, 0
    %p99 = por %p97, %p98
    %p100 = scmp.ne.s32.totalorder %s88, %s89
    %p101 = scmp.eq.s32.totalorder %s16, 1
    %p102 = por %p100, %p101
    %p104 = scmp.ne.s32.totalorder %s89, %s103
    %p105 = scmp.eq.s32.totalorder %s16, 0
    %p106 = por %p104, %p105
    %s107 = ssub.s32 %s10, %s17
    %p108 = scmp.eq.s32.totalorder %s107, 0
    %s110 = sadd.s32 %s109, 1
    %s111 = scalar_select %p108, %s109, %s110
    %p114 = pneg %p108
    %p115 = scmp.eq.s32.totalorder %s10, 1
    %p116 = por %p114, %p115
    %p117 = scmp.ne.s32.totalorder %s109, %s112
    %p118 = scmp.eq.s32.totalorder %s10, 0
    %p119 = por %p117, %p118
    %p120 = scmp.ne.s32.totalorder %s109, %s112
    %p121 = scmp.eq.s32.totalorder %s15, 1
    %p122 = por %p120, %p121
    %p123 = scmp.ne.s32.totalorder %s112, %s113
    %p124 = scmp.eq.s32.totalorder %s15, 0
    %p125 = por %p123, %p124
    %p126 = scmp.ne.s32.totalorder %s112, %s113
    %p127 = scmp.eq.s32.totalorder %s16, 1
    %p128 = por %p126, %p127
    %p130 = scmp.ne.s32.totalorder %s113, %s129
    %p131 = scmp.eq.s32.totalorder %s16, 0
    %p132 = por %p130, %p131
    %p133 = scmp.le.s32.totalorder 1, %s10
    %p134 = scmp.lt.s32.totalorder %s10, 3
    %p135 = pnand %p133, %p134
    %p136 = pneg %p135
    // Predicated region
    $region9: #{mlps_forward.1} parent=5 // pred_check
      _
    $region10: #{mlps_forward.1} parent=5 // pred_check_branch
      %138 = sbr.rel (%p135) target = $region12
    $region11: #{mlps_forward.1} parent=5 // pred_region
      %s139 = ssub.s32 %s10, 1
      // Predicated region
      $region13: #{mlps_forward.1} parent=11 // pred_check
        %p140 = pneg %p31
      $region14: #{mlps_forward.1} parent=11 // pred_check_branch
        %142 = sbr.rel (%p140) target = $region16
      $region15: #{mlps_forward.1} parent=11 // pred_region
        _
      $region16: #{mlps_forward.1} parent=11 // pred_fallthru
        _
      // Predicated region
      $region17: #{mlps_forward.1} parent=11 // pred_check
        %p143 = pneg %p78
      $region18: #{mlps_forward.1} parent=11 // pred_check_branch
        %145 = sbr.rel (%p143) target = $region20
      $region19: #{mlps_forward.1} parent=11 // pred_region
        _
      $region20: #{mlps_forward.1} parent=11 // pred_fallthru
        _
      // Predicated region
      $region21: #{mlps_forward.1} parent=11 // pred_check
        %p146 = pneg %p99
      $region22: #{mlps_forward.1} parent=11 // pred_check_branch
        %148 = sbr.rel (%p146) target = $region24
      $region23: #{mlps_forward.1} parent=11 // pred_region
        _
      $region24: #{mlps_forward.1} parent=11 // pred_fallthru
        _
    $region12: #{mlps_forward.1} parent=5 // pred_fallthru
      _
    %p149 = scmp.lt.s32.totalorder %s10, 2
    // Predicated region
    $region25: #{mlps_forward.1} parent=5 // pred_check
      %p150 = pneg %p149
    $region26: #{mlps_forward.1} parent=5 // pred_check_branch
      %152 = sbr.rel (%p150) target = $region28
    $region27: #{mlps_forward.1} parent=5 // pred_region
      // Predicated region
      $region29: #{mlps_forward.1} parent=27 // pred_check
        %p153 = pneg %p51
      $region30: #{mlps_forward.1} parent=27 // pred_check_branch
        %155 = sbr.rel (%p153) target = $region32
      $region31: #{mlps_forward.1} parent=27 // pred_region
        %p156 = scmp.lt.s32.totalorder %s10, 1
        %s157 = scalar_select %p156, %s10, 1
        %s158 = smul.addr %s157, 2
        %s159 = smul.addr %s158, 4
        %s160 = scalar_lea.vmem %s1, %s159
      $region32: #{mlps_forward.1} parent=27 // pred_fallthru
        _
    $region28: #{mlps_forward.1} parent=5 // pred_fallthru
      _
    %p161 = scmp.le.s32.totalorder 1, %s10
    %p162 = scmp.lt.s32.totalorder %s10, 3
    %p163 = pnand %p161, %p162
    %p164 = pneg %p163
    // Predicated region
    $region33: #{mlps_forward.1} parent=5 // pred_check
      _
    $region34: #{mlps_forward.1} parent=5 // pred_check_branch
      %166 = sbr.rel (%p163) target = $region36
    $region35: #{mlps_forward.1} parent=5 // pred_region
      %s167 = ssub.s32 %s10, 1
      %p168 = pneg %p31
      %p169 = pneg %p28
      %p170 = scmp.lt.s32.totalorder %s15, 1
      %s171 = scalar_select %p170, %s15, 1
      %s172 = smul.addr %s171, 2
      %s173 = smul.addr %s172, 4
      %s174 = scalar_lea.vmem %s1, %s173
      %p175 = pneg %p57
      %p176 = pneg %p54
      %p177 = pneg %p78
      %p178 = pneg %p75
      %p179 = pneg %p99
      %p180 = pneg %p96
      %p181 = pneg %p125
      %p182 = pneg %p122
      %p183 = scmp.lt.s32.totalorder %s15, 1
      %s184 = scalar_select %p183, %s15, 1
      %s185 = smul.addr %s184, 2
      %s186 = smul.addr %s185, 8
      %s187 = scalar_lea.vmem %s4, %s186
      %p188 = scmp.lt.s32.totalorder %s15, 1
      %s189 = scalar_select %p188, %s15, 1
      %s190 = smul.addr %s189, 2
      %s191 = smul.addr %s190, 4
      %s192 = scalar_lea.vmem %s1, %s191
      %p193 = scmp.lt.s32.totalorder %s15, 1
      %s194 = scalar_select %p193, %s15, 1
      %s195 = smul.addr %s194, 2
      %s196 = smul.addr %s195, 8
      %s197 = scalar_lea.vmem %s4, %s196
      %v198 = vld [vmem:[%s192] sm:$0xff]
      %v200 = vcombine.high %v198, %v198
      %vm202 = vcmask 1043456
      %v203 = vsel %vm202, %v198, 0.0
      %v204 = vsel %vm202, %v200, 0.0
      %v205 = vadd.f32 %v203, %v204
      %206 = vadd.xlane.f32.xlu0 %v205
      %v207 = vpop.xlane.xlu0 %206
      %v208 = vmul.f32 %v207, 0.00390625
      %v211 = vunpack.c.l.s4 839922192
      %v212 = vunpack.c.0.s8 %v211
      %v213 = vlaneseq
      %v214 = vshrl.u32 %v213, 7
      %v215 = vsub.s32 %v212, %v214
      %v216 = vrot.slane %v208, %v215
      %v218 = vsub.f32 %v198, %v216
      %v219 = vmul.f32 %v218, %v218
      %v221 = vcombine.high %v219, %v219
      %v223 = vsel %vm202, %v219, 0.0
      %v224 = vsel %vm202, %v221, 0.0
      %v225 = vadd.f32 %v223, %v224
      %226 = vadd.xlane.f32.xlu0 %v225
      %v227 = vpop.xlane.xlu0 %226
      %v228 = vmul.f32 %v227, 0.00390625
      %v229 = vadd.f32 %v228, 0.001
      %v230 = vrsqrt.pop %v229
      %v231 = vld [vmem:[%s0] sm:$0xf]
      %v232 = vmul.f32 %v230, %v231
      %234 = vset.pattern.permute.xlu0 0
      %235 = vperm.xlu0 %234, %v232
      %v236 = vpop.permute.xlu0 %235
      %v238 = vunpack.c.l.s4 839922192
      %v239 = vunpack.c.0.s8 %v238
      %v240 = vlaneseq
      %v241 = vshrl.u32 %v240, 7
      %v242 = vsub.s32 %v239, %v241
      %v243 = vrot.slane %v236, %v242
      %v245 = vmul.f32 %v218, %v243
      %247 = vset.pattern.permute.xlu0 1
      %248 = vperm.xlu0 %247, %v231
      %v249 = vpop.permute.xlu0 %248
      %v251 = vunpack.c.l.s4 839922192
      %v252 = vunpack.c.0.s8 %v251
      %v253 = vlaneseq
      %v254 = vshrl.u32 %v253, 7
      %v255 = vsub.s32 %v252, %v254
      %v256 = vrot.slane %v249, %v255
      %v258 = vadd.f32 %v245, %v256
      %v259 = vmax.f32 %v258, 0.0
      %v260 = vld [vmem:[%s2] sm:$0xff]
      %v261 = vld [vmem:[%s3] sm:$0xff]
      %263 = vset.pattern.permute.xlu0 0
      %264 = vperm.xlu0 %263, %v261
      %v265 = vpop.permute.xlu0 %264
      %v268 = vcombine.high %v259, %v259
      %vm269 = vcmask 31744
      %v271 = vsel %vm269, %v260, 0
      %v273 = vsel %vm202, %v259, 0
      %v275 = vsel %vm202, %v268, 0
      %277 = vmatprep.subr.mxu0 0.0
      %278 = vmatpush1.msra.mxu0 0.0
      %279 = vmatprep.subr.mxu0 0.0
      %280 = vmatpush1.msra.mxu0 0.0
      %281 = vmatprep.subr.mxu0 0.0
      %282 = vmatpush1.msra.mxu0 0.0
      %283 = vmatprep.subr.mxu0 0.0
      %284 = vmatpush1.msra.mxu0 0.0
      %285 = vmatprep.subr.mxu0 0.0
      %286 = vmatpush1.msra.mxu0 0.0
      %287 = vmatprep.subr.mxu0 0.0
      %288 = vmatpush1.msra.mxu0 0.0
      %289 = vmatprep.subr.mxu0 0.0
      %290 = vmatpush1.msra.mxu0 0.0
      %291 = vmatprep.subr.mxu0 0.0
      %292 = vmatpush1.msra.mxu0 0.0
      %293 = vmatprep.subr.mxu0 0.0
      %294 = vmatpush1.msra.mxu0 0.0
      %295 = vmatprep.subr.mxu0 0.0
      %296 = vmatpush1.msra.mxu0 0.0
      %297 = vmatprep.subr.mxu0 0.0
      %298 = vmatpush1.msra.mxu0 0.0
      %299 = vmatprep.subr.mxu0 0.0
      %300 = vmatpush1.msra.mxu0 0.0
      %301 = vmatprep.subr.mxu0 0.0
      %302 = vmatpush1.msra.mxu0 0.0
      %303 = vmatprep.subr.mxu0 0.0
      %304 = vmatpush1.msra.mxu0 0.0
      %305 = vmatprep.subr.mxu0 0.0
      %306 = vmatpush1.msra.mxu0 0.0
      %307 = vmatprep.subr.mxu0 %v275
      %308 = vmatpush1.msra.mxu0 %v273
      %309 = vmatprep.subr.mxu0 0.0
      %310 = vmatpush2.msra.mxu0 0.0
      %311 = vmatprep.subr.mxu0 0.0
      %312 = vmatpush2.msra.mxu0 0.0
      %313 = vmatprep.subr.mxu0 0.0
      %314 = vmatpush2.msra.mxu0 0.0
      %315 = vmatprep.subr.mxu0 0.0
      %316 = vmatpush2.msra.mxu0 0.0
      %317 = vmatprep.subr.mxu0 0.0
      %318 = vmatpush2.msra.mxu0 0.0
      %319 = vmatprep.subr.mxu0 0.0
      %320 = vmatpush2.msra.mxu0 0.0
      %321 = vmatprep.subr.mxu0 0.0
      %322 = vmatpush2.msra.mxu0 0.0
      %323 = vmatprep.subr.mxu0 0.0
      %324 = vmatpush2.msra.mxu0 0.0
      %325 = vmatprep.subr.mxu0 0.0
      %326 = vmatpush2.msra.mxu0 0.0
      %327 = vmatprep.subr.mxu0 0.0
      %328 = vmatpush2.msra.mxu0 0.0
      %329 = vmatprep.subr.mxu0 0.0
      %330 = vmatpush2.msra.mxu0 0.0
      %331 = vmatprep.subr.mxu0 0.0
      %332 = vmatpush2.msra.mxu0 0.0
      %333 = vmatprep.subr.mxu0 0.0
      %334 = vmatpush2.msra.mxu0 0.0
      %335 = vmatprep.subr.mxu0 0.0
      %336 = vmatpush2.msra.mxu0 0.0
      %337 = vmatprep.subr.mxu0 0.0
      %338 = vmatpush2.msra.mxu0 0.0
      %339 = vmatprep.subr.mxu0 0.0
      %340 = vmatpush2.msra.mxu0 0.0
      %341 = vmatprep.mubr.f32.mxu0 0.0
      %342 = vmatmul.mubr.f32.gmra.mxu0 %v271
      %v343 = vpop.f32.mrf.mxu0
      %v344 = vadd.f32 %v265, %v343
      %v345 = vpop.f32.mrf.mxu0
      %v346 = vadd.f32 %v265, %v345
      %347 = vdwg.mxu0
      %348 = vst [vmem:[%s197] sm:$0xff] %v344
      %349 = vst [vmem:[%s197 + $0x8] sm:$0xff] %v346
      %p350 = scmp.lt.s32.totalorder %s15, 1
      %s351 = scalar_select %p350, %s15, 1
      %s352 = smul.addr %s351, 2
      %s353 = smul.addr %s352, 8
      %s354 = scalar_lea.vmem %s4, %s353
      // Predicated region
      $region37: #{mlps_forward.1} parent=35 // pred_check
        %p355 = pneg %p122
      $region38: #{mlps_forward.1} parent=35 // pred_check_branch
        %357 = sbr.rel (%p355) target = $region40
      $region39: #{mlps_forward.1} parent=35 // pred_region
        _
      $region40: #{mlps_forward.1} parent=35 // pred_fallthru
        _
    $region36: #{mlps_forward.1} parent=5 // pred_fallthru
      _
    %p358 = scmp.le.s32.totalorder 2, %s10
    // Predicated region
    $region41: #{mlps_forward.1} parent=5 // pred_check
      %p359 = pneg %p358
    $region42: #{mlps_forward.1} parent=5 // pred_check_branch
      %361 = sbr.rel (%p359) target = $region44
    $region43: #{mlps_forward.1} parent=5 // pred_region
      %s362 = ssub.s32 %s10, 2
      // Predicated region
      $region45: #{mlps_forward.1} parent=43 // pred_check
        %p363 = pneg %p128
      $region46: #{mlps_forward.1} parent=43 // pred_check_branch
        %365 = sbr.rel (%p363) target = $region48
      $region47: #{mlps_forward.1} parent=43 // pred_region
        %p366 = scmp.lt.s32.totalorder %s16, 1
        %s367 = scalar_select %p366, %s16, 1
        %s368 = smul.addr %s367, 2
        %s369 = smul.addr %s368, 8
        %s370 = scalar_lea.vmem %s4, %s369
      $region48: #{mlps_forward.1} parent=43 // pred_fallthru
        _
    $region44: #{mlps_forward.1} parent=5 // pred_fallthru
      _
  $region6: #{mlps_forward.1} parent=0 // loop_footer
    %s14 = sadd.s32 1, %s10
  $region7: #{mlps_forward.1} parent=0 // loop_footer_branch
    %9 = sbr.rel target = $region3
  $region8: #{mlps_forward.1} parent=0 // loop_exit
    _

</llo_original>
